<compile_context>
chip_gen: v5e
topology: v5e:2x2
jax: 0.10.0
libtpu: 0.0.40
codegen_flags: <defaults>
</compile_context>

<pallas_src>
import math
import functools

import jax
import jax.numpy as jnp
from jax import lax
from jax.experimental import pallas as pl
from jax.experimental.pallas import tpu as pltpu


# ---------------------------------------------------------------------------
# Buffer setup (plain JAX glue, matches the PyTorch __init__ exactly)
# ---------------------------------------------------------------------------
def make_positional_encoding(seq_len: int, d_model: int) -> jnp.ndarray:
    position = jnp.arange(0, seq_len, dtype=jnp.float32)[:, None]            # (S, 1)
    div_term = jnp.exp(
        jnp.arange(0, d_model, 2, dtype=jnp.float32)
        * (-math.log(10000.0) / d_model)
    )                                                                        # (D/2,)
    pe = jnp.zeros((seq_len, d_model), dtype=jnp.float32)
    pe = pe.at[:, 0::2].set(jnp.sin(position * div_term))
    pe = pe.at[:, 1::2].set(jnp.cos(position * div_term))
    return pe[None]                                                          # (1, S, D)


# ---------------------------------------------------------------------------
# Kernels
# ---------------------------------------------------------------------------
def _add_pe_kernel(x_ref, pe_ref, o_ref):
    # eval-mode forward: x + pe  (dropout is identity); pe broadcasts over rows
    o_ref[...] = x_ref[...] + pe_ref[...]


def _mix_bits(u):
    # murmur3-style 32-bit finalizer: pure VPU integer ops, good avalanche.
    u = u ^ (u >> 16)
    u = u * jnp.uint32(0x7FEB352D)
    u = u ^ (u >> 15)
    u = u * jnp.uint32(0x846CA68B)
    u = u ^ (u >> 16)
    return u


def _add_pe_dropout_kernel(x_ref, pe_ref, o_ref, *, p, seed, n_cols):
    # training-mode forward: inverted dropout(x + pe), keep prob = 1 - p.
    y = x_ref[...] + pe_ref[...]

    r_blk, c_blk = x_ref.shape
    # global (row, col) of every element in this block -> unique counter per element
    row0 = (pl.program_id(1) * r_blk).astype(jnp.uint32)
    col0 = (pl.program_id(0) * c_blk).astype(jnp.uint32)
    rows = lax.broadcasted_iota(jnp.int32, (r_blk, c_blk), 0).astype(jnp.uint32) + row0
    cols = lax.broadcasted_iota(jnp.int32, (r_blk, c_blk), 1).astype(jnp.uint32) + col0
    idx = rows * jnp.uint32(n_cols) + cols

    bits = _mix_bits(idx + jnp.uint32(seed & 0xFFFFFFFF) * jnp.uint32(0x9E3779B9))

    # integer-domain keep test: P(bits >= thr) == 1 - p  (no float convert chain)
    thr = jnp.uint32(min(int(round(p * (2.0 ** 32))), (1 << 32) - 1))
    keep = bits >= thr

    scale = jnp.asarray(1.0 / (1.0 - p), dtype=y.dtype)
    o_ref[...] = jnp.where(keep, y * scale, jnp.zeros_like(y)).astype(o_ref.dtype)


# ---------------------------------------------------------------------------
# Tiling helpers + wrapper
# ---------------------------------------------------------------------------
def _pick_block(dim: int, align: int, target: int) -> int:
    """Largest multiple of `align` that divides `dim` and is <= target; else `dim`."""
    if dim >= align and dim % align == 0:
        blk = min(dim, max(align, (target // align) * align))
        while dim % blk != 0:
            blk -= align
        return blk
    return dim  # full extent (allowed: block dim == array dim)


def positional_encoding_forward(x, pe, *, p=0.1, training=False, seed=0):
    """x: (B, S, D); pe: (1, seq_len_max, D). Returns (B, S, D)."""
    B, S, D = x.shape
    N = S * D

    # Lane-dense 2D views: last dim is S*D (a multiple of 128 whenever possible),
    # avoiding masked partial stores when d_model < 128.
    x2 = x.reshape(B, N)
    pe2 = pe[:, :S, :].reshape(1, N).astype(x.dtype)

    # Column tiles: multiples of 128 lanes (target ~4096). Row tiles: sized so each
    # buffer is <= ~2 MiB f32 -> 6 double-buffered tiles fit v5e's 16 MiB scoped VMEM.
    c_blk = _pick_block(N, 128, 4096)
    row_target = max(1, (512 * 1024) // c_blk)
    r_blk = _pick_block(B, 8, row_target)

    # col axis outer, batch axis inner -> pe block index constant across inner steps
    grid = (N // c_blk, B // r_blk)

    x_spec = pl.BlockSpec((r_blk, c_blk), lambda c, r: (r, c))
    pe_spec = pl.BlockSpec((1, c_blk), lambda c, r: (0, c))
    out_spec = pl.BlockSpec((r_blk, c_blk), lambda c, r: (r, c))

    itemsize = jnp.dtype(x.dtype).itemsize
    cost = pl.CostEstimate(
        flops=B * N,
        transcendentals=0,
        bytes_accessed=(2 * B * N + N) * itemsize,
    )

    if (not training) or p == 0.0:
        kernel = _add_pe_kernel
    else:
        assert 0.0 < p < 1.0, "training dropout requires 0 < p < 1"
        kernel = functools.partial(
            _add_pe_dropout_kernel, p=float(p), seed=int(seed), n_cols=N
        )

    out2 = pl.pallas_call(
        kernel,
        out_shape=jax.ShapeDtypeStruct((B, N), x.dtype),
        grid=grid,
        in_specs=[x_spec, pe_spec],
        out_specs=out_spec,
        compiler_params=pltpu.CompilerParams(
            dimension_semantics=("parallel", "parallel"),
        ),
        cost_estimate=cost,
    )(x2, pe2)

    return out2.reshape(B, S, D)


# ---------------------------------------------------------------------------
# Demo / self-check
# ---------------------------------------------------------------------------
if __name__ == "__main__":
    # config: seq_len=8, d_model=32, dropout=0.1, batch=2
    B, S, D = 2, 8, 32
    p = 0.1

    key = jax.random.PRNGKey(0)
    x = jax.random.normal(key, (B, S, D), dtype=jnp.float32)
    pe = make_positional_encoding(seq_len=S, d_model=D)
    ref = x + pe[:, :S, :]

    # eval-mode (dropout is identity) -> exact check against x + pe
    out_eval = jax.block_until_ready(
        positional_encoding_forward(x, pe, p=p, training=False)
    )
    assert out_eval.shape == (B, S, D) and out_eval.dtype == x.dtype
    assert jnp.allclose(out_eval, ref, atol=1e-6), "eval-mode mismatch"

    # training-mode: every output element is either exactly 0 (dropped) or
    # (x + pe) / (1 - p) (kept), and the keep fraction is plausible.
    out_train = jax.block_until_ready(
        positional_encoding_forward(x, pe, p=p, training=True, seed=1234)
    )
    assert out_train.shape == (B, S, D) and out_train.dtype == x.dtype
    scale = 1.0 / (1.0 - p)
    dropped = out_train == 0.0
    kept_ok = jnp.isclose(out_train, ref * scale, rtol=1e-5, atol=1e-5)
    assert bool(jnp.all(jnp.logical_or(dropped, kept_ok))), "train-mode value mismatch"
    keep_frac = 1.0 - float(jnp.mean(dropped.astype(jnp.float32)))
    assert 0.7 <= keep_frac <= 1.0, f"implausible keep fraction {keep_frac}"

    print("KERNEL_OK")
</pallas_src>

<mosaic_0001>
module attributes {stable_mosaic.version = 11 : i64} {
  func.func @_add_pe_kernel(%arg0: i32, %arg1: i32, %arg2: memref<2x256xf32, #tpu.memory_space<vmem>>, %arg3: memref<1x256xf32, #tpu.memory_space<vmem>>, %arg4: memref<2x256xf32, #tpu.memory_space<vmem>>) attributes {dimension_semantics = [#tpu.dimension_semantics<parallel>, #tpu.dimension_semantics<parallel>], iteration_bounds = array<i64: 1, 1>, scalar_prefetch = 0 : i64, scratch_operands = 0 : i64, tpu.core_type = #tpu.core_type<tc>, window_params = [{transform_indices = @transform_0, window_bounds = array<i64: 2, 256>}, {transform_indices = @transform_1, window_bounds = array<i64: 1, 256>}, {transform_indices = @transform_2, window_bounds = array<i64: 2, 256>}]} {
    %c0 = arith.constant 0 : index
    %c0_0 = arith.constant 0 : index
    %0 = vector.load %arg2[%c0, %c0_0] : memref<2x256xf32, #tpu.memory_space<vmem>>, vector<2x256xf32>
    %c0_1 = arith.constant 0 : index
    %c0_2 = arith.constant 0 : index
    %1 = vector.load %arg3[%c0_1, %c0_2] : memref<1x256xf32, #tpu.memory_space<vmem>>, vector<1x256xf32>
    %2 = vector.broadcast %1 : vector<1x256xf32> to vector<2x256xf32>
    %3 = arith.addf %0, %2 : vector<2x256xf32>
    %c0_3 = arith.constant 0 : index
    %c0_4 = arith.constant 0 : index
    %4 = vector.load %arg4[%c0_3, %c0_4] : memref<2x256xf32, #tpu.memory_space<vmem>>, vector<2x256xf32>
    tpu.vector_store %arg4[%c0_3, %c0_4], %3 {strides = array<i32>} : memref<2x256xf32, #tpu.memory_space<vmem>>, vector<2x256xf32>,
    return
  }
  func.func @transform_0(%arg0: i32, %arg1: i32) -> (i32, i32) {
    %c0_i32 = arith.constant 0 : i32
    return %arg1, %arg0 : i32, i32
  }
  func.func @transform_1(%arg0: i32, %arg1: i32) -> (i32, i32) {
    %c0_i32 = arith.constant 0 : i32
    %c0_i32_0 = arith.constant 0 : i32
    return %c0_i32, %arg0 : i32, i32
  }
  func.func @transform_2(%arg0: i32, %arg1: i32) -> (i32, i32) {
    %c0_i32 = arith.constant 0 : i32
    return %arg1, %arg0 : i32, i32
  }
}

</mosaic_0001>

<llo_original>
// kernel: tpu_custom_call.1
$region0: #{tpu_custom_call.1}
  #allocation0 [shape = 'u32[]', space=smem, size = 0x4, offset = 0x4, fixed_abs, tag = 'smem constant byte address 0x4 - core index']
  #allocation1 [shape = 'u32[72,128]{1,0:T(1,128)}', space=vmem, size = 0x9000, scoped, tag = 'internal scratch']
  %s0 = inlined_call_operand.hbm [shape: f32[2,256], index: 0, kind: input, shape index: {}]
  %s1 = inlined_call_operand.hbm [shape: f32[1,256], index: 1, kind: input, shape index: {}]
  %s2 = inlined_call_operand.hbm [shape: f32[2,256], index: 2, kind: output, shape index: {}]
  %s3 = sld [smem:[#allocation0]]
  $region26: #{tpu_custom_call.1} parent=0
    _
  %s5 = ssub.s32 1, %s3
  %s6 = scalar_select 0, %s5, %s3
  $region1: #{tpu_custom_call.1} parent=0
    #allocation2 [shape = 'u8[2048]{0}', space=vmem, size = 0x800, scoped, tag = 'input window, operand 0, single buffered']
    #allocation3 [shape = 's32[1]{0}', space=sflag, size = 0x4, scoped, tag = 'scoped memory for tpu_custom_call.1']
    #allocation4 [shape = 's32[1]{0}', space=sflag, size = 0x4, scoped, tag = 'scoped memory for tpu_custom_call.1']
    #allocation5 [shape = 'u8[1024]{0}', space=vmem, size = 0x400, scoped, tag = 'input window, operand 1, single buffered']
    #allocation6 [shape = 's32[1]{0}', space=sflag, size = 0x4, scoped, tag = 'scoped memory for tpu_custom_call.1']
    #allocation7 [shape = 'u8[2048]{0}', space=vmem, size = 0x800, scoped, tag = 'output window, operand 0, single buffered']
    %7 = vsyncpa [#allocation3], 0
    %8 = vsyncpa [#allocation6], 0
    %9 = vsyncpa [#allocation4], 0
    // Predicated region
    $region2: #{tpu_custom_call.1} parent=1 // pred_check
      _
    $region3: #{tpu_custom_call.1} parent=1 // pred_check_branch
      %11 = sbr.rel (0) target = $region5
    $region4: #{tpu_custom_call.1} parent=1 // pred_region
      %13 = vsyncadd [#allocation3], 0
      %s15 = sshll.u32 %s0, 4
      %s16 = int_to_ptr.hbm [resolvable:$true] %s15
      %s17 = sshll.u32 [#allocation2], 4
      %s18 = int_to_ptr.vmem [resolvable:$true] %s17
      %20 = dma.hbm_to_vmem [thread:$0]  %s16, 64, %s18, [#allocation3]
    $region5: #{tpu_custom_call.1} parent=1 // pred_fallthru
      _
    // Predicated region
    $region6: #{tpu_custom_call.1} parent=1 // pred_check
      _
    $region7: #{tpu_custom_call.1} parent=1 // pred_check_branch
      %22 = sbr.rel (0) target = $region9
    $region8: #{tpu_custom_call.1} parent=1 // pred_region
      %24 = vsyncadd [#allocation6], 0
      %s26 = sshll.u32 %s1, 4
      %s27 = int_to_ptr.hbm [resolvable:$true] %s26
      %s28 = sshll.u32 [#allocation5], 4
      %s29 = int_to_ptr.vmem [resolvable:$true] %s28
      %31 = dma.hbm_to_vmem [thread:$0]  %s27, 32, %s29, [#allocation6]
    $region9: #{tpu_custom_call.1} parent=1 // pred_fallthru
      _
    // Predicated region
    $region10: #{tpu_custom_call.1} parent=1 // pred_check
      _
    $region11: #{tpu_custom_call.1} parent=1 // pred_check_branch
      %33 = sbr.rel (0) target = $region13
    $region12: #{tpu_custom_call.1} parent=1 // pred_region
      %35 = dma.done [#allocation3], 64
    $region13: #{tpu_custom_call.1} parent=1 // pred_fallthru
      _
    // Predicated region
    $region14: #{tpu_custom_call.1} parent=1 // pred_check
      _
    $region15: #{tpu_custom_call.1} parent=1 // pred_check_branch
      %37 = sbr.rel (0) target = $region17
    $region16: #{tpu_custom_call.1} parent=1 // pred_region
      %39 = dma.done [#allocation6], 32
    $region17: #{tpu_custom_call.1} parent=1 // pred_fallthru
      _
    %v40 = vld [vmem:[#allocation2] sm:$0xf]
    %v41 = vld [vmem:[#allocation5] sm:$0x3]
    %v43 = vperm.slane %v41, 0
    %v44 = vperm.slane %v41, 1
    %v45 = vrot.slane %v44, 6
    %vm46 = vcmask 1041408
    %v47 = vsel %vm46, %v43, %v45
    %v49 = vadd.f32 %v40, %v47
    %50 = vst [vmem:[#allocation7] sm:$0xf] %v49
    // Predicated region
    $region18: #{tpu_custom_call.1} parent=1 // pred_check
      _
    $region19: #{tpu_custom_call.1} parent=1 // pred_check_branch
      %52 = sbr.rel (0) target = $region21
    $region20: #{tpu_custom_call.1} parent=1 // pred_region
      %54 = vsyncadd [#allocation4], 0
      %s56 = sshll.u32 [#allocation7], 4
      %s57 = int_to_ptr.vmem [resolvable:$true] %s56
      %s58 = sshll.u32 %s2, 4
      %s59 = int_to_ptr.hbm [resolvable:$true] %s58
      %61 = dma.vmem_to_hbm [thread:$0]  %s57, 64, %s59, [#allocation4]
    $region21: #{tpu_custom_call.1} parent=1 // pred_fallthru
      _
    // Predicated region
    $region22: #{tpu_custom_call.1} parent=1 // pred_check
      _
    $region23: #{tpu_custom_call.1} parent=1 // pred_check_branch
      %63 = sbr.rel (0) target = $region25
    $region24: #{tpu_custom_call.1} parent=1 // pred_region
      %65 = dma.done [#allocation4], 64
    $region25: #{tpu_custom_call.1} parent=1 // pred_fallthru
      _
    %66 = vsyncpa [#allocation3], 1
    %67 = vsyncpa [#allocation6], 1
    %68 = vsyncpa [#allocation4], 1

</llo_original>
